<compile_context>
chip_gen: v7x
topology: tpu7x:2x2x1
jax: 0.10.0
libtpu: 0.0.40
codegen_flags: <defaults>
</compile_context>

<pallas_src>
import functools
import inspect

import jax
import jax.numpy as jnp
from jax.experimental import pallas as pl
from jax.experimental.pallas import tpu as pltpu

_MIB = 1024 * 1024


def _round_up(x, m):
    return ((x + m - 1) // m) * m


def _cdiv(a, b):
    return (a + b - 1) // b


def _supports_single_buffering():
    """Explicit capability check for pl.Buffered(1) on constant-index blocks."""
    if not hasattr(pl, "Buffered"):
        return False
    try:
        return "pipeline_mode" in inspect.signature(pl.BlockSpec).parameters
    except (TypeError, ValueError):
        return False


def _vmem_capacity_bytes():
    """Per-TensorCore VMEM capacity; conservative (v7x) default if unavailable."""
    if hasattr(pltpu, "get_tpu_info"):
        try:
            cap = getattr(pltpu.get_tpu_info(), "vmem_capacity_bytes", None)
            if cap:
                return int(cap)
        except Exception:
            # Optional hardware query only; never masks kernel errors.
            pass
    return 64 * _MIB


def _vmem_need_bytes(bm, tn, h_pad, bn_pad, act_bytes):
    n_cols = h_pad // tn
    wup_bufs = 1 if n_cols == 1 else 2
    return (2 * bm * h_pad * act_bytes          # x tiles (double buffered)
            + 2 * bm * tn * act_bytes           # out tiles (double buffered)
            + h_pad * bn_pad * 2                # w_down bf16 (single buffer)
            + wup_bufs * bn_pad * tn * 2        # w_up bf16 tile(s)
            + bm * bn_pad * 2                   # bottleneck scratch (bf16)
            + (2 * h_pad + bn_pad) * 4          # gamma / beta / b_down
            + wup_bufs * tn * 4                 # b_up tile(s)
            + bm * (h_pad + bn_pad) * 4)        # f32 temporaries headroom


def _select_tiles(n_rows, h_pad, bn_pad, act_bytes, budget, block_rows):
    rows128 = _round_up(max(n_rows, 1), 128)

    bm_cands = []
    for bm_t in (block_rows, 256, 128):
        bm = min(bm_t, rows128)
        if bm not in bm_cands:
            bm_cands.append(bm)

    tn_cands = [h_pad]
    for t in (2048, 1024, 512, 256, 128):
        if t < h_pad and h_pad % t == 0:
            tn_cands.append(t)

    bm_sel, tn_sel = bm_cands[-1], tn_cands[-1]
    done = False
    for bm in bm_cands:                 # largest row tile first
        for tn in tn_cands:             # widest column tile first
            if _vmem_need_bytes(bm, tn, h_pad, bn_pad, act_bytes) <= budget:
                bm_sel, tn_sel = bm, tn
                done = True
                break
        if done:
            break

    # Guarantee >= 2 row-grid steps (keeps both v7x TensorCores busy) whenever
    # that adds no extra row padding (rows128 // 2 is always a multiple of 64).
    if _cdiv(rows128, bm_sel) == 1 and rows128 >= 256:
        bm_sel = rows128 // 2
    return bm_sel, tn_sel


def _residual_adapter_kernel(x_ref, gamma_ref, beta_ref, wd_ref, bd_ref,
                             wu_ref, bu_ref, o_ref, h_ref, *, inv_h):
    j = pl.program_id(1)

    @pl.when(j == 0)
    def _():
        # LayerNorm (f32, one-pass stats over the true hidden size) ->
        # down-proj (bf16 MXU, f32 acc) -> ReLU, cached for all column tiles.
        x = x_ref[...].astype(jnp.float32)                     # (bm, H_pad)
        s1 = jnp.sum(x, axis=-1, keepdims=True)
        s2 = jnp.sum(x * x, axis=-1, keepdims=True)
        mean = s1 * inv_h
        var = jnp.maximum(s2 * inv_h - mean * mean, 0.0)
        xn = (x - mean) * jax.lax.rsqrt(var + 1e-5)
        xn = xn * gamma_ref[...] + beta_ref[...]
        h = jnp.dot(xn.astype(jnp.bfloat16), wd_ref[...],
                    preferred_element_type=jnp.float32)
        h_ref[...] = jnp.maximum(h + bd_ref[...], 0.0).astype(h_ref.dtype)

    # Up-projection for this column tile (bf16 MXU, f32 acc); fold bias and
    # residual into one elementwise epilogue, re-reading the resident x tile.
    y = jnp.dot(h_ref[...], wu_ref[...], preferred_element_type=jnp.float32)
    tn = o_ref.shape[-1]
    col0 = pl.multiple_of(j * tn, 128)
    x_res = x_ref[:, pl.ds(col0, tn)].astype(jnp.float32)
    o_ref[...] = (y + bu_ref[...] + x_res).astype(o_ref.dtype)


def residual_adapter(x, gamma, beta, w_down, b_down, w_up, b_up, *,
                     block_rows=512):
    """x: (..., H). gamma/beta: (H,), w_down: (H, Bn), b_down: (Bn,),
    w_up: (Bn, H), b_up: (H,).  Weights are [in, out]."""
    orig_shape = x.shape
    H = orig_shape[-1]
    Bn = w_down.shape[1]

    x2 = x.reshape(-1, H)
    N = x2.shape[0]
    act_bytes = x2.dtype.itemsize

    # Lane-dense padding: hidden and bottleneck dims to multiples of 128.
    # TODO(synk): benchmark rounding bn_pad to 256 on v6e/v7x (2x256x256 MXU).
    h_pad = _round_up(H, 128)
    bn_pad = _round_up(Bn, 128)

    # VMEM budget: generation aware, never request the full physical capacity.
    capacity = _vmem_capacity_bytes()
    vmem_limit = (capacity * 7) // 8        # ~112 MiB v5e/v6e, ~56 MiB v7x
    tile_budget = max(vmem_limit - 6 * _MIB, 8 * _MIB)

    bm, tn = _select_tiles(N, h_pad, bn_pad, act_bytes, tile_budget, block_rows)
    grid_rows = _cdiv(N, bm)
    n_pad = grid_rows * bm
    n_cols = h_pad // tn

    # Zero padding keeps the math exact: zero gamma/beta columns give xn == 0
    # on padded hidden columns, relu(0) bottleneck entries meet zero w_up rows,
    # padded w_up/b_up output columns are sliced away, and LN stats divide by
    # the true H.
    if n_pad != N or h_pad != H:
        x2 = jnp.pad(x2, ((0, n_pad - N), (0, h_pad - H)))
    if h_pad != H or bn_pad != Bn:
        w_down = jnp.pad(w_down, ((0, h_pad - H), (0, bn_pad - Bn)))
        w_up = jnp.pad(w_up, ((0, bn_pad - Bn), (0, h_pad - H)))
        b_down = jnp.pad(b_down, (0, bn_pad - Bn))
        b_up = jnp.pad(b_up, (0, h_pad - H))
        gamma = jnp.pad(gamma, (0, h_pad - H))
        beta = jnp.pad(beta, (0, h_pad - H))

    # bf16 weights for the MXU fast path; LN params and biases stay f32.
    wd = w_down.astype(jnp.bfloat16)
    wu = w_up.astype(jnp.bfloat16)
    gamma2 = gamma.reshape(1, h_pad).astype(jnp.float32)
    beta2 = beta.reshape(1, h_pad).astype(jnp.float32)
    bd2 = b_down.reshape(1, bn_pad).astype(jnp.float32)
    bu2 = b_up.reshape(1, h_pad).astype(jnp.float32)

    kernel = functools.partial(_residual_adapter_kernel, inv_h=1.0 / H)

    cost = pl.CostEstimate(
        flops=4 * n_pad * h_pad * bn_pad,                         # two matmuls
        transcendentals=n_pad,                                    # rsqrt per row
        bytes_accessed=(2 * n_pad * h_pad * act_bytes             # x in + out
                        + h_pad * bn_pad * 2                      # w_down (resident)
                        + (grid_rows if n_cols > 1 else 1) * h_pad * bn_pad * 2
                        + (3 * h_pad + bn_pad) * 4),
    )

    single_buf_ok = _supports_single_buffering()

    def _run(use_single_buffering):
        def spec(shape, index_map, single):
            if single and use_single_buffering:
                # Constant-index blocks don't need double buffering.
                return pl.BlockSpec(shape, index_map,
                                    pipeline_mode=pl.Buffered(buffer_count=1))
            return pl.BlockSpec(shape, index_map)

        return pl.pallas_call(
            kernel,
            out_shape=jax.ShapeDtypeStruct((n_pad, h_pad), x.dtype),
            grid_spec=pltpu.PrefetchScalarGridSpec(
                num_scalar_prefetch=0,
                grid=(grid_rows, n_cols),
                in_specs=[
                    # x row tile: index constant in j, so it is fetched once per
                    # row step and reused for every output-column step.
                    pl.BlockSpec((bm, h_pad), lambda i, j: (i, 0)),
                    spec((1, h_pad), lambda i, j: (0, 0), True),           # gamma
                    spec((1, h_pad), lambda i, j: (0, 0), True),           # beta
                    spec((h_pad, bn_pad), lambda i, j: (0, 0), True),      # w_down
                    spec((1, bn_pad), lambda i, j: (0, 0), True),          # b_down
                    spec((bn_pad, tn), lambda i, j: (0, j), n_cols == 1),  # w_up tile
                    spec((1, tn), lambda i, j: (0, j), n_cols == 1),       # b_up tile
                ],
                out_specs=pl.BlockSpec((bm, tn), lambda i, j: (i, j)),
                scratch_shapes=[pltpu.VMEM((bm, bn_pad), jnp.bfloat16)],   # ReLU(down)
            ),
            compiler_params=pltpu.CompilerParams(
                dimension_semantics=("parallel", "arbitrary"),
                vmem_limit_bytes=vmem_limit,
            ),
            cost_estimate=cost,
        )(x2, gamma2, beta2, wd, bd2, wu, bu2)

    if single_buf_ok:
        try:
            out = _run(True)
        except pltpu.LoweringException:
            # Only if this Mosaic version rejects Buffered(1); any other error
            # propagates loudly instead of silently doubling weight VMEM.
            out = _run(False)
    else:
        out = _run(False)

    return out[:N, :H].reshape(orig_shape)


def make_params(key, hidden_sz, projection_factor=3.2):
    # bottleneck size exactly as in the PyTorch module
    bottleneck_sz = int(hidden_sz / projection_factor)
    bottleneck_sz = bottleneck_sz + (8 - bottleneck_sz % 8)

    k1, k2, k3, k4 = jax.random.split(key, 4)
    # nn.LayerNorm defaults: weight=1, bias=0
    gamma = jnp.ones((hidden_sz,), jnp.float32)
    beta = jnp.zeros((hidden_sz,), jnp.float32)
    # nn.Linear-style uniform init, deterministic; stored as [in, out]
    lim_d = 1.0 / (hidden_sz ** 0.5)
    w_down = jax.random.uniform(k1, (hidden_sz, bottleneck_sz), jnp.float32, -lim_d, lim_d)
    b_down = jax.random.uniform(k2, (bottleneck_sz,), jnp.float32, -lim_d, lim_d)
    lim_u = 1.0 / (bottleneck_sz ** 0.5)
    w_up = jax.random.uniform(k3, (bottleneck_sz, hidden_sz), jnp.float32, -lim_u, lim_u)
    b_up = jax.random.uniform(k4, (hidden_sz,), jnp.float32, -lim_u, lim_u)
    return gamma, beta, w_down, b_down, w_up, b_up


def reference_f32(x, gamma, beta, w_down, b_down, w_up, b_up):
    mean = jnp.mean(x, axis=-1, keepdims=True)
    var = jnp.mean((x - mean) ** 2, axis=-1, keepdims=True)
    xn = (x - mean) / jnp.sqrt(var + 1e-5) * gamma + beta
    h = jnp.maximum(xn @ w_down + b_down, 0.0)
    return h @ w_up + b_up + x


def reference_mixed(x, gamma, beta, w_down, b_down, w_up, b_up):
    # Mirrors the kernel's math: one-pass LN stats in f32, bf16 MXU operands,
    # f32 accumulation.
    xf = x.astype(jnp.float32)
    h_sz = x.shape[-1]
    mean = jnp.sum(xf, axis=-1, keepdims=True) / h_sz
    var = jnp.maximum(jnp.sum(xf * xf, axis=-1, keepdims=True) / h_sz - mean * mean, 0.0)
    xn = (xf - mean) * jax.lax.rsqrt(var + 1e-5) * gamma + beta
    h = jnp.dot(xn.astype(jnp.bfloat16), w_down.astype(jnp.bfloat16),
                preferred_element_type=jnp.float32) + b_down
    h = jnp.maximum(h, 0.0).astype(jnp.bfloat16)
    y = jnp.dot(h, w_up.astype(jnp.bfloat16), preferred_element_type=jnp.float32)
    return y + b_up + xf


if __name__ == "__main__":
    hidden_sz = 32
    batch, seq = 2, 8     # N = 16 rows

    key = jax.random.PRNGKey(0)
    kx, kp = jax.random.split(key)
    x = jax.random.normal(kx, (batch, seq, hidden_sz), jnp.float32)
    params = make_params(kp, hidden_sz)

    out = residual_adapter(x, *params)
    out = jax.block_until_ready(out)
    assert out.shape == x.shape

    ref_mp = reference_mixed(x, *params)
    ref_fp = reference_f32(x, *params)
    assert jnp.allclose(out, ref_mp, atol=2e-3, rtol=2e-3), "mismatch vs mixed-precision reference"
    assert jnp.allclose(out, ref_fp, atol=6e-2, rtol=6e-2), "mismatch vs f32 reference"

    print("KERNEL_OK")
</pallas_src>

<mosaic_0001>
module attributes {stable_mosaic.version = 11 : i64} {
  func.func @_residual_adapter_kernel(%arg0: i32, %arg1: i32, %arg2: memref<128x128xf32, #tpu.memory_space<vmem>>, %arg3: memref<1x128xf32, #tpu.memory_space<vmem>>, %arg4: memref<1x128xf32, #tpu.memory_space<vmem>>, %arg5: memref<128x128xbf16, #tpu.memory_space<vmem>>, %arg6: memref<1x128xf32, #tpu.memory_space<vmem>>, %arg7: memref<128x128xbf16, #tpu.memory_space<vmem>>, %arg8: memref<1x128xf32, #tpu.memory_space<vmem>>, %arg9: memref<128x128xf32, #tpu.memory_space<vmem>>, %arg10: memref<128x128xbf16, #tpu.memory_space<vmem>>) attributes {dimension_semantics = [#tpu.dimension_semantics<parallel>, #tpu.dimension_semantics<arbitrary>], iteration_bounds = array<i64: 1, 1>, scalar_prefetch = 0 : i64, scratch_operands = 1 : i64, tpu.core_type = #tpu.core_type<tc>, window_params = [{transform_indices = @transform_0, window_bounds = array<i64: 128, 128>}, {pipeline_mode = #tpu.pipeline_mode<synchronous>, transform_indices = @transform_1, window_bounds = array<i64: 1, 128>}, {pipeline_mode = #tpu.pipeline_mode<synchronous>, transform_indices = @transform_2, window_bounds = array<i64: 1, 128>}, {pipeline_mode = #tpu.pipeline_mode<synchronous>, transform_indices = @transform_3, window_bounds = array<i64: 128, 128>}, {pipeline_mode = #tpu.pipeline_mode<synchronous>, transform_indices = @transform_4, window_bounds = array<i64: 1, 128>}, {pipeline_mode = #tpu.pipeline_mode<synchronous>, transform_indices = @transform_5, window_bounds = array<i64: 128, 128>}, {pipeline_mode = #tpu.pipeline_mode<synchronous>, transform_indices = @transform_6, window_bounds = array<i64: 1, 128>}, {transform_indices = @transform_7, window_bounds = array<i64: 128, 128>}]} {
    %c0_i32 = arith.constant 0 : i32
    %0 = arith.cmpi eq, %arg1, %c0_i32 : i32
    %1 = arith.extui %0 : i1 to i32
    %c0_i32_0 = arith.constant 0 : i32
    %2 = arith.cmpi ne, %1, %c0_i32_0 : i32
    scf.if %2 {
      %c0_9 = arith.constant 0 : index
      %c0_10 = arith.constant 0 : index
      %15 = vector.load %arg2[%c0_9, %c0_10] : memref<128x128xf32, #tpu.memory_space<vmem>>, vector<128x128xf32>
      %cst_11 = arith.constant dense<0.000000e+00> : vector<128xf32>
      %16 = vector.multi_reduction <add>, %15, %cst_11 [1] : vector<128x128xf32> to vector<128xf32>
      %17 = vector.shape_cast %16 : vector<128xf32> to vector<128x1xf32>
      %18 = arith.mulf %15, %15 : vector<128x128xf32>
      %cst_12 = arith.constant dense<0.000000e+00> : vector<128xf32>
      %19 = vector.multi_reduction <add>, %18, %cst_12 [1] : vector<128x128xf32> to vector<128xf32>
      %20 = vector.shape_cast %19 : vector<128xf32> to vector<128x1xf32>
      %cst_13 = arith.constant 3.125000e-02 : f32
      %21 = vector.broadcast %cst_13 : f32 to vector<128x1xf32>
      %22 = arith.mulf %17, %21 : vector<128x1xf32>
      %cst_14 = arith.constant 3.125000e-02 : f32
      %23 = vector.broadcast %cst_14 : f32 to vector<128x1xf32>
      %24 = arith.mulf %20, %23 : vector<128x1xf32>
      %25 = arith.mulf %22, %22 : vector<128x1xf32>
      %26 = arith.subf %24, %25 : vector<128x1xf32>
      %cst_15 = arith.constant 0.000000e+00 : f32
      %27 = vector.broadcast %cst_15 : f32 to vector<128x1xf32>
      %28 = arith.maximumf %26, %27 : vector<128x1xf32>
      %29 = vector.broadcast %22 : vector<128x1xf32> to vector<128x128xf32>
      %30 = arith.subf %15, %29 : vector<128x128xf32>
      %cst_16 = arith.constant 9.99999974E-6 : f32
      %31 = vector.broadcast %cst_16 : f32 to vector<128x1xf32>
      %32 = arith.addf %28, %31 : vector<128x1xf32>
      %33 = math.rsqrt %32 : vector<128x1xf32>
      %34 = vector.broadcast %33 : vector<128x1xf32> to vector<128x128xf32>
      %35 = arith.mulf %30, %34 : vector<128x128xf32>
      %c0_17 = arith.constant 0 : index
      %c0_18 = arith.constant 0 : index
      %36 = vector.load %arg3[%c0_17, %c0_18] : memref<1x128xf32, #tpu.memory_space<vmem>>, vector<1x128xf32>
      %37 = vector.broadcast %36 : vector<1x128xf32> to vector<128x128xf32>
      %38 = arith.mulf %35, %37 : vector<128x128xf32>
      %c0_19 = arith.constant 0 : index
      %c0_20 = arith.constant 0 : index
      %39 = vector.load %arg4[%c0_19, %c0_20] : memref<1x128xf32, #tpu.memory_space<vmem>>, vector<1x128xf32>
      %40 = vector.broadcast %39 : vector<1x128xf32> to vector<128x128xf32>
      %41 = arith.addf %38, %40 : vector<128x128xf32>
      %42 = arith.truncf %41 : vector<128x128xf32> to vector<128x128xbf16>
      %c0_21 = arith.constant 0 : index
      %c0_22 = arith.constant 0 : index
      %43 = vector.load %arg5[%c0_21, %c0_22] : memref<128x128xbf16, #tpu.memory_space<vmem>>, vector<128x128xbf16>
      %cst_23 = arith.constant dense<0.000000e+00> : vector<128x128xf32>
      %44 = tpu.matmul %42, %43, %cst_23 {dimension_numbers = #tpu.dot_dimension_numbers<[1], [0], [0], [1], [0, 0, 1, 1], [], []>} : vector<128x128xbf16>, vector<128x128xbf16>, vector<128x128xf32> -> vector<128x128xf32>
      %c0_24 = arith.constant 0 : index
      %c0_25 = arith.constant 0 : index
      %45 = vector.load %arg6[%c0_24, %c0_25] : memref<1x128xf32, #tpu.memory_space<vmem>>, vector<1x128xf32>
      %46 = vector.broadcast %45 : vector<1x128xf32> to vector<128x128xf32>
      %47 = arith.addf %44, %46 : vector<128x128xf32>
      %cst_26 = arith.constant 0.000000e+00 : f32
      %48 = vector.broadcast %cst_26 : f32 to vector<128x128xf32>
      %49 = arith.maximumf %47, %48 : vector<128x128xf32>
      %50 = arith.truncf %49 : vector<128x128xf32> to vector<128x128xbf16>
      %c0_27 = arith.constant 0 : index
      %c0_28 = arith.constant 0 : index
      %51 = vector.load %arg10[%c0_27, %c0_28] : memref<128x128xbf16, #tpu.memory_space<vmem>>, vector<128x128xbf16>
      tpu.vector_store %arg10[%c0_27, %c0_28], %50 {strides = array<i32>} : memref<128x128xbf16, #tpu.memory_space<vmem>>, vector<128x128xbf16>,
    } else {
    }
    %c0 = arith.constant 0 : index
    %c0_1 = arith.constant 0 : index
    %3 = vector.load %arg10[%c0, %c0_1] : memref<128x128xbf16, #tpu.memory_space<vmem>>, vector<128x128xbf16>
    %c0_2 = arith.constant 0 : index
    %c0_3 = arith.constant 0 : index
    %4 = vector.load %arg7[%c0_2, %c0_3] : memref<128x128xbf16, #tpu.memory_space<vmem>>, vector<128x128xbf16>
    %cst = arith.constant dense<0.000000e+00> : vector<128x128xf32>
    %5 = tpu.matmul %3, %4, %cst {dimension_numbers = #tpu.dot_dimension_numbers<[1], [0], [0], [1], [0, 0, 1, 1], [], []>} : vector<128x128xbf16>, vector<128x128xbf16>, vector<128x128xf32> -> vector<128x128xf32>
    %c128_i32 = arith.constant 128 : i32
    %6 = arith.muli %arg1, %c128_i32 : i32
    %7 = tpu.assume_multiple %6, 128 : i32
    %c0_4 = arith.constant 0 : index
    %8 = arith.index_cast %7 : i32 to index
    %9 = vector.load %arg2[%c0_4, %8] : memref<128x128xf32, #tpu.memory_space<vmem>>, vector<128x128xf32>
    %c0_5 = arith.constant 0 : index
    %c0_6 = arith.constant 0 : index
    %10 = vector.load %arg8[%c0_5, %c0_6] : memref<1x128xf32, #tpu.memory_space<vmem>>, vector<1x128xf32>
    %11 = vector.broadcast %10 : vector<1x128xf32> to vector<128x128xf32>
    %12 = arith.addf %5, %11 : vector<128x128xf32>
    %13 = arith.addf %12, %9 : vector<128x128xf32>
    %c0_7 = arith.constant 0 : index
    %c0_8 = arith.constant 0 : index
    %14 = vector.load %arg9[%c0_7, %c0_8] : memref<128x128xf32, #tpu.memory_space<vmem>>, vector<128x128xf32>
    tpu.vector_store %arg9[%c0_7, %c0_8], %13 {strides = array<i32>} : memref<128x128xf32, #tpu.memory_space<vmem>>, vector<128x128xf32>,
    return
  }
  func.func @transform_0(%arg0: i32, %arg1: i32) -> (i32, i32) {
    %c0_i32 = arith.constant 0 : i32
    %c0_i32_0 = arith.constant 0 : i32
    return %arg0, %c0_i32 : i32, i32
  }
  func.func @transform_1(%arg0: i32, %arg1: i32) -> (i32, i32) {
    %c0_i32 = arith.constant 0 : i32
    %c0_i32_0 = arith.constant 0 : i32
    %c0_i32_1 = arith.constant 0 : i32
    return %c0_i32, %c0_i32_0 : i32, i32
  }
  func.func @transform_2(%arg0: i32, %arg1: i32) -> (i32, i32) {
    %c0_i32 = arith.constant 0 : i32
    %c0_i32_0 = arith.constant 0 : i32
    %c0_i32_1 = arith.constant 0 : i32
    return %c0_i32, %c0_i32_0 : i32, i32
  }
  func.func @transform_3(%arg0: i32, %arg1: i32) -> (i32, i32) {
    %c0_i32 = arith.constant 0 : i32
    %c0_i32_0 = arith.constant 0 : i32
    %c0_i32_1 = arith.constant 0 : i32
    return %c0_i32, %c0_i32_0 : i32, i32
  }
  func.func @transform_4(%arg0: i32, %arg1: i32) -> (i32, i32) {
    %c0_i32 = arith.constant 0 : i32
    %c0_i32_0 = arith.constant 0 : i32
    %c0_i32_1 = arith.constant 0 : i32
    return %c0_i32, %c0_i32_0 : i32, i32
  }
  func.func @transform_5(%arg0: i32, %arg1: i32) -> (i32, i32) {
    %c0_i32 = arith.constant 0 : i32
    %c0_i32_0 = arith.constant 0 : i32
    return %c0_i32, %arg1 : i32, i32
  }
  func.func @transform_6(%arg0: i32, %arg1: i32) -> (i32, i32) {
    %c0_i32 = arith.constant 0 : i32
    %c0_i32_0 = arith.constant 0 : i32
    return %c0_i32, %arg1 : i32, i32
  }
  func.func @transform_7(%arg0: i32, %arg1: i32) -> (i32, i32) {
    %c0_i32 = arith.constant 0 : i32
    return %arg0, %arg1 : i32, i32
  }
}

</mosaic_0001>

<llo_original>
// kernel: tpu_custom_call.1
$region0: #{tpu_custom_call.1}
  #allocation0 [shape = 'u32[]', space=smem, size = 0x4, offset = 0x4, fixed_abs, tag = 'smem constant byte address 0x4 - core index']
  #allocation1 [shape = 'u32[144,128]{1,0:T(1,128)}', space=vmem, size = 0x12000, scoped, tag = 'internal scratch']
  #allocation2 [shape = 'bf16[128,128]{1,0:T(16,128)(2,1)}', space=vmem, size = 0x8000, scoped, tag = 'scratch operand']
  %s0 = inlined_call_operand.hbm [shape: f32[128,128], index: 0, kind: input, shape index: {}]
  %s1 = inlined_call_operand.vmem [shape: f32[1,128], index: 1, kind: input, shape index: {}]
  %s2 = inlined_call_operand.vmem [shape: f32[1,128], index: 2, kind: input, shape index: {}]
  %s3 = inlined_call_operand.hbm [shape: bf16[128,128], index: 3, kind: input, shape index: {}]
  %s4 = inlined_call_operand.vmem [shape: f32[1,128], index: 4, kind: input, shape index: {}]
  %s5 = inlined_call_operand.hbm [shape: bf16[128,128], index: 5, kind: input, shape index: {}]
  %s6 = inlined_call_operand.vmem [shape: f32[1,128], index: 6, kind: input, shape index: {}]
  %s7 = inlined_call_operand.hbm [shape: f32[128,128], index: 7, kind: output, shape index: {}]
  %s8 = sld [smem:[#allocation0]]
  $region54: #{tpu_custom_call.1} parent=0
    _
  %s10 = ssub.s32 1, %s8
  %s11 = scalar_select 0, %s10, %s8
  $region1: #{tpu_custom_call.1} parent=0
    #allocation3 [shape = 'u8[65536]{0}', space=vmem, size = 0x10000, scoped, tag = 'input window, operand 0, single buffered']
    #allocation4 [shape = 's32[1]{0}', space=sflag, size = 0x4, scoped, tag = 'scoped memory for tpu_custom_call.1']
    #allocation5 [shape = 's32[1]{0}', space=sflag, size = 0x4, scoped, tag = 'scoped memory for tpu_custom_call.1']
    #allocation6 [shape = 'u8[32768]{0}', space=vmem, size = 0x8000, scoped, tag = 'input window, operand 3, single buffered']
    #allocation7 [shape = 's32[1]{0}', space=sflag, size = 0x4, scoped, tag = 'scoped memory for tpu_custom_call.1']
    #allocation8 [shape = 'u8[32768]{0}', space=vmem, size = 0x8000, scoped, tag = 'input window, operand 5, single buffered']
    #allocation9 [shape = 'u8[65536]{0}', space=vmem, size = 0x10000, scoped, tag = 'output window, operand 0, single buffered']
    %12 = vsyncpa [#allocation4], 0
    %13 = vsyncpa [#allocation7], 0
    %14 = vsyncpa [#allocation5], 0
    // Predicated region
    $region2: #{tpu_custom_call.1} parent=1 // pred_check
      _
    $region3: #{tpu_custom_call.1} parent=1 // pred_check_branch
      %16 = sbr.rel (0) target = $region5
    $region4: #{tpu_custom_call.1} parent=1 // pred_region
      %s18 = ssub.s32 2048, 2048
      %19 = vsyncadd [#allocation4], %s18
      %s20 = sshll.u32 [#allocation3], 4
      %s21 = int_to_ptr.vmem [resolvable:$true] %s20
      %26 = dma.hbm_to_vmem [thread:$0]  %s0, 2048, %s21, [#allocation4], 128, 128, 8
    $region5: #{tpu_custom_call.1} parent=1 // pred_fallthru
      _
    // Predicated region
    $region6: #{tpu_custom_call.1} parent=1 // pred_check
      _
    $region7: #{tpu_custom_call.1} parent=1 // pred_check_branch
      %28 = sbr.rel (0) target = $region9
    $region8: #{tpu_custom_call.1} parent=1 // pred_region
      _
    $region9: #{tpu_custom_call.1} parent=1 // pred_fallthru
      _
    // Predicated region
    $region10: #{tpu_custom_call.1} parent=1 // pred_check
      _
    $region11: #{tpu_custom_call.1} parent=1 // pred_check_branch
      %30 = sbr.rel (0) target = $region13
    $region12: #{tpu_custom_call.1} parent=1 // pred_region
      _
    $region13: #{tpu_custom_call.1} parent=1 // pred_fallthru
      _
    // Predicated region
    $region14: #{tpu_custom_call.1} parent=1 // pred_check
      _
    $region15: #{tpu_custom_call.1} parent=1 // pred_check_branch
      %32 = sbr.rel (0) target = $region17
    $region16: #{tpu_custom_call.1} parent=1 // pred_region
      %s34 = ssub.s32 1024, 1024
      %35 = vsyncadd [#allocation7], %s34
      %s36 = sshll.u32 [#allocation6], 4
      %s37 = int_to_ptr.vmem [resolvable:$true] %s36
      %42 = dma.hbm_to_vmem [thread:$0]  %s3, 1024, %s37, [#allocation7], 64, 64, 4
    $region17: #{tpu_custom_call.1} parent=1 // pred_fallthru
      _
    // Predicated region
    $region18: #{tpu_custom_call.1} parent=1 // pred_check
      _
    $region19: #{tpu_custom_call.1} parent=1 // pred_check_branch
      %44 = sbr.rel (0) target = $region21
    $region20: #{tpu_custom_call.1} parent=1 // pred_region
      _
    $region21: #{tpu_custom_call.1} parent=1 // pred_fallthru
      _
    // Predicated region
    $region22: #{tpu_custom_call.1} parent=1 // pred_check
      _
    $region23: #{tpu_custom_call.1} parent=1 // pred_check_branch
      %46 = sbr.rel (0) target = $region25
    $region24: #{tpu_custom_call.1} parent=1 // pred_region
      %s48 = ssub.s32 1024, 1024
      %49 = vsyncadd [#allocation7], %s48
      %s50 = sshll.u32 [#allocation8], 4
      %s51 = int_to_ptr.vmem [resolvable:$true] %s50
      %56 = dma.hbm_to_vmem [thread:$0]  %s5, 1024, %s51, [#allocation7], 64, 64, 4
    $region25: #{tpu_custom_call.1} parent=1 // pred_fallthru
      _
    // Predicated region
    $region26: #{tpu_custom_call.1} parent=1 // pred_check
      _
    $region27: #{tpu_custom_call.1} parent=1 // pred_check_branch
      %58 = sbr.rel (0) target = $region29
    $region28: #{tpu_custom_call.1} parent=1 // pred_region
      _
    $region29: #{tpu_custom_call.1} parent=1 // pred_fallthru
      _
    // Predicated region
    $region30: #{tpu_custom_call.1} parent=1 // pred_check
      _
    $region31: #{tpu_custom_call.1} parent=1 // pred_check_branch
      %60 = sbr.rel (0) target = $region33
    $region32: #{tpu_custom_call.1} parent=1 // pred_region
      %61 = dma.done [#allocation4], 2048
    $region33: #{tpu_custom_call.1} parent=1 // pred_fallthru
      _
    // Predicated region
    $region34: #{tpu_custom_call.1} parent=1 // pred_check
      _
    $region35: #{tpu_custom_call.1} parent=1 // pred_check_branch
      %63 = sbr.rel (0) target = $region37
    $region36: #{tpu_custom_call.1} parent=1 // pred_region
      %64 = dma.done [#allocation7], 1024
    $region37: #{tpu_custom_call.1} parent=1 // pred_fallthru
      _
    // Predicated region
    $region38: #{tpu_custom_call.1} parent=1 // pred_check
      _
    $region39: #{tpu_custom_call.1} parent=1 // pred_check_branch
      %66 = sbr.rel (0) target = $region41
    $region40: #{tpu_custom_call.1} parent=1 // pred_region
      %67 = dma.done [#allocation7], 1024
    $region41: #{tpu_custom_call.1} parent=1 // pred_fallthru
      _
    %p69 = scmp.eq.s32.totalorder 0, 0
    // Predicated region
    $region42: #{tpu_custom_call.1} parent=1 // pred_check
      %p70 = pneg %p69
    $region43: #{tpu_custom_call.1} parent=1 // pred_check_branch
      %72 = sbr.rel (%p70) target = $region45
    $region44: #{tpu_custom_call.1} parent=1 // pred_region
      %v73 = vld [vmem:[#allocation3] sm:$0xff]
      %v74 = vld [vmem:[#allocation3 + $0x8] sm:$0xff]
      %v75 = vld [vmem:[#allocation3 + $0x10] sm:$0xff]
      %v76 = vld [vmem:[#allocation3 + $0x18] sm:$0xff]
      %v77 = vld [vmem:[#allocation3 + $0x20] sm:$0xff]
      %v78 = vld [vmem:[#allocation3 + $0x28] sm:$0xff]
      %v79 = vld [vmem:[#allocation3 + $0x30] sm:$0xff]
      %v80 = vld [vmem:[#allocation3 + $0x38] sm:$0xff]
      %v81 = vld [vmem:[#allocation3 + $0x40] sm:$0xff]
      %v82 = vld [vmem:[#allocation3 + $0x48] sm:$0xff]
      %v83 = vld [vmem:[#allocation3 + $0x50] sm:$0xff]
      %v84 = vld [vmem:[#allocation3 + $0x58] sm:$0xff]
      %v85 = vld [vmem:[#allocation3 + $0x60] sm:$0xff]
      %v86 = vld [vmem:[#allocation3 + $0x68] sm:$0xff]
      %v87 = vld [vmem:[#allocation3 + $0x70] sm:$0xff]
      %v88 = vld [vmem:[#allocation3 + $0x78] sm:$0xff]
      %89 = vadd.xlane.f32.xlu0 %v73
      %v90 = vpop.xlane.xlu0 %89
      %91 = vadd.xlane.f32.xlu0 %v74
      %v92 = vpop.xlane.xlu0 %91
      %93 = vadd.xlane.f32.xlu0 %v75
      %v94 = vpop.xlane.xlu0 %93
      %95 = vadd.xlane.f32.xlu0 %v76
      %v96 = vpop.xlane.xlu0 %95
      %97 = vadd.xlane.f32.xlu0 %v77
      %v98 = vpop.xlane.xlu0 %97
      %99 = vadd.xlane.f32.xlu0 %v78
      %v100 = vpop.xlane.xlu0 %99
      %101 = vadd.xlane.f32.xlu0 %v79
      %v102 = vpop.xlane.xlu0 %101
      %103 = vadd.xlane.f32.xlu0 %v80
      %v104 = vpop.xlane.xlu0 %103
      %105 = vadd.xlane.f32.xlu0 %v81
      %v106 = vpop.xlane.xlu0 %105
      %107 = vadd.xlane.f32.xlu0 %v82
      %v108 = vpop.xlane.xlu0 %107
      %109 = vadd.xlane.f32.xlu0 %v83
      %v110 = vpop.xlane.xlu0 %109
      %111 = vadd.xlane.f32.xlu0 %v84
      %v112 = vpop.xlane.xlu0 %111
      %113 = vadd.xlane.f32.xlu0 %v85
      %v114 = vpop.xlane.xlu0 %113
      %115 = vadd.xlane.f32.xlu0 %v86
      %v116 = vpop.xlane.xlu0 %115
      %117 = vadd.xlane.f32.xlu0 %v87
      %v118 = vpop.xlane.xlu0 %117
      %119 = vadd.xlane.f32.xlu0 %v88
      %v120 = vpop.xlane.xlu0 %119
      %v121 = vmul.f32 %v73, %v73
      %v122 = vmul.f32 %v74, %v74
      %v123 = vmul.f32 %v75, %v75
      %v124 = vmul.f32 %v76, %v76
      %v125 = vmul.f32 %v77, %v77
      %v126 = vmul.f32 %v78, %v78
      %v127 = vmul.f32 %v79, %v79
      %v128 = vmul.f32 %v80, %v80
      %v129 = vmul.f32 %v81, %v81
      %v130 = vmul.f32 %v82, %v82
      %v131 = vmul.f32 %v83, %v83
      %v132 = vmul.f32 %v84, %v84
      %v133 = vmul.f32 %v85, %v85
      %v134 = vmul.f32 %v86, %v86
      %v135 = vmul.f32 %v87, %v87
      %v136 = vmul.f32 %v88, %v88
      %137 = vadd.xlane.f32.xlu0 %v121
      %v138 = vpop.xlane.xlu0 %137
      %139 = vadd.xlane.f32.xlu0 %v122
      %v140 = vpop.xlane.xlu0 %139
      %141 = vadd.xlane.f32.xlu0 %v123
      %v142 = vpop.xlane.xlu0 %141
      %143 = vadd.xlane.f32.xlu0 %v124
      %v144 = vpop.xlane.xlu0 %143
      %145 = vadd.xlane.f32.xlu0 %v125
      %v146 = vpop.xlane.xlu0 %145
      %147 = vadd.xlane.f32.xlu0 %v126
      %v148 = vpop.xlane.xlu0 %147
      %149 = vadd.xlane.f32.xlu0 %v127
      %v150 = vpop.xlane.xlu0 %149
      %151 = vadd.xlane.f32.xlu0 %v128
      %v152 = vpop.xlane.xlu0 %151
      %153 = vadd.xlane.f32.xlu0 %v129
      %v154 = vpop.xlane.xlu0 %153
      %155 = vadd.xlane.f32.xlu0 %v130
      %v156 = vpop.xlane.xlu0 %155
      %157 = vadd.xlane.f32.xlu0 %v131
      %v158 = vpop.xlane.xlu0 %157
      %159 = vadd.xlane.f32.xlu0 %v132
      %v160 = vpop.xlane.xlu0 %159
      %161 = vadd.xlane.f32.xlu0 %v133
      %v162 = vpop.xlane.xlu0 %161
      %163 = vadd.xlane.f32.xlu0 %v134
      %v164 = vpop.xlane.xlu0 %163
      %165 = vadd.xlane.f32.xlu0 %v135
      %v166 = vpop.xlane.xlu0 %165
      %167 = vadd.xlane.f32.xlu0 %v136
      %v168 = vpop.xlane.xlu0 %167
      %v169 = vmul.f32 %v90, 0.03125
      %v170 = vmul.f32 %v92, 0.03125
      %v171 = vmul.f32 %v94, 0.03125
      %v172 = vmul.f32 %v96, 0.03125
      %v173 = vmul.f32 %v98, 0.03125
      %v174 = vmul.f32 %v100, 0.03125
      %v175 = vmul.f32 %v102, 0.03125
      %v176 = vmul.f32 %v104, 0.03125
      %v177 = vmul.f32 %v106, 0.03125
      %v178 = vmul.f32 %v108, 0.03125
      %v179 = vmul.f32 %v110, 0.03125
      %v180 = vmul.f32 %v112, 0.03125
      %v181 = vmul.f32 %v114, 0.03125
      %v182 = vmul.f32 %v116, 0.03125
      %v183 = vmul.f32 %v118, 0.03125
      %v184 = vmul.f32 %v120, 0.03125
      %v185 = vmul.f32 %v138, 0.03125
      %v186 = vmul.f32 %v140, 0.03125
      %v187 = vmul.f32 %v142, 0.03125
      %v188 = vmul.f32 %v144, 0.03125
      %v189 = vmul.f32 %v146, 0.03125
      %v190 = vmul.f32 %v148, 0.03125
      %v191 = vmul.f32 %v150, 0.03125
      %v192 = vmul.f32 %v152, 0.03125
      %v193 = vmul.f32 %v154, 0.03125
      %v194 = vmul.f32 %v156, 0.03125
      %v195 = vmul.f32 %v158, 0.03125
      %v196 = vmul.f32 %v160, 0.03125
      %v197 = vmul.f32 %v162, 0.03125
      %v198 = vmul.f32 %v164, 0.03125
      %v199 = vmul.f32 %v166, 0.03125
      %v200 = vmul.f32 %v168, 0.03125
      %v201 = vmul.f32 %v169, %v169
      %v202 = vmul.f32 %v170, %v170
      %v203 = vmul.f32 %v171, %v171
      %v204 = vmul.f32 %v172, %v172
      %v205 = vmul.f32 %v173, %v173
      %v206 = vmul.f32 %v174, %v174
      %v207 = vmul.f32 %v175, %v175
      %v208 = vmul.f32 %v176, %v176
      %v209 = vmul.f32 %v177, %v177
      %v210 = vmul.f32 %v178, %v178
      %v211 = vmul.f32 %v179, %v179
      %v212 = vmul.f32 %v180, %v180
      %v213 = vmul.f32 %v181, %v181
      %v214 = vmul.f32 %v182, %v182
      %v215 = vmul.f32 %v183, %v183
      %v216 = vmul.f32 %v184, %v184
      %v217 = vsub.f32 %v185, %v201
      %v218 = vsub.f32 %v186, %v202
      %v219 = vsub.f32 %v187, %v203
      %v220 = vsub.f32 %v188, %v204
      %v221 = vsub.f32 %v189, %v205
      %v222 = vsub.f32 %v190, %v206
      %v223 = vsub.f32 %v191, %v207
      %v224 = vsub.f32 %v192, %v208
      %v225 = vsub.f32 %v193, %v209
      %v226 = vsub.f32 %v194, %v210
      %v227 = vsub.f32 %v195, %v211
      %v228 = vsub.f32 %v196, %v212
      %v229 = vsub.f32 %v197, %v213
      %v230 = vsub.f32 %v198, %v214
      %v231 = vsub.f32 %v199, %v215
      %v232 = vsub.f32 %v200, %v216
      %v233 = vmax.f32 %v217, 0.0
      %v234 = vmax.f32 %v218, 0.0
      %v235 = vmax.f32 %v219, 0.0
      %v236 = vmax.f32 %v220, 0.0
      %v237 = vmax.f32 %v221, 0.0
      %v238 = vmax.f32 %v222, 0.0
      %v239 = vmax.f32 %v223, 0.0
      %v240 = vmax.f32 %v224, 0.0
      %v241 = vmax.f32 %v225, 0.0
      %v242 = vmax.f32 %v226, 0.0
      %v243 = vmax.f32 %v227, 0.0
      %v244 = vmax.f32 %v228, 0.0
      %v245 = vmax.f32 %v229, 0.0
      %v246 = vmax.f32 %v230, 0.0
      %v247 = vmax.f32 %v231, 0.0
      %v248 = vmax.f32 %v232, 0.0
      %v249 = vsub.f32 %v73, %v169
      %v250 = vsub.f32 %v74, %v170
      %v251 = vsub.f32 %v75, %v171
      %v252 = vsub.f32 %v76, %v172
      %v253 = vsub.f32 %v77, %v173
      %v254 = vsub.f32 %v78, %v174
      %v255 = vsub.f32 %v79, %v175
      %v256 = vsub.f32 %v80, %v176
      %v257 = vsub.f32 %v81, %v177
      %v258 = vsub.f32 %v82, %v178
      %v259 = vsub.f32 %v83, %v179
      %v260 = vsub.f32 %v84, %v180
      %v261 = vsub.f32 %v85, %v181
      %v262 = vsub.f32 %v86, %v182
      %v263 = vsub.f32 %v87, %v183
      %v264 = vsub.f32 %v88, %v184
      %v265 = vadd.f32 %v233, 1e-05
      %v266 = vadd.f32 %v234, 1e-05
      %v267 = vadd.f32 %v235, 1e-05
      %v268 = vadd.f32 %v236, 1e-05
      %v269 = vadd.f32 %v237, 1e-05
      %v270 = vadd.f32 %v238, 1e-05
      %v271 = vadd.f32 %v239, 1e-05
      %v272 = vadd.f32 %v240, 1e-05
      %v273 = vadd.f32 %v241, 1e-05
      %v274 = vadd.f32 %v242, 1e-05
      %v275 = vadd.f32 %v243, 1e-05
      %v276 = vadd.f32 %v244, 1e-05
      %v277 = vadd.f32 %v245, 1e-05
      %v278 = vadd.f32 %v246, 1e-05
      %v279 = vadd.f32 %v247, 1e-05
      %v280 = vadd.f32 %v248, 1e-05
      %v281 = vrsqrt.pop %v265
      %v282 = vrsqrt.pop %v266
      %v283 = vrsqrt.pop %v267
      %v284 = vrsqrt.pop %v268
      %v285 = vrsqrt.pop %v269
      %v286 = vrsqrt.pop %v270
      %v287 = vrsqrt.pop %v271
      %v288 = vrsqrt.pop %v272
      %v289 = vrsqrt.pop %v273
      %v290 = vrsqrt.pop %v274
      %v291 = vrsqrt.pop %v275
      %v292 = vrsqrt.pop %v276
      %v293 = vrsqrt.pop %v277
      %v294 = vrsqrt.pop %v278
      %v295 = vrsqrt.pop %v279
      %v296 = vrsqrt.pop %v280
      %v297 = vmul.f32 %v249, %v281
      %v298 = vmul.f32 %v250, %v282
      %v299 = vmul.f32 %v251, %v283
      %v300 = vmul.f32 %v252, %v284
      %v301 = vmul.f32 %v253, %v285
      %v302 = vmul.f32 %v254, %v286
      %v303 = vmul.f32 %v255, %v287
      %v304 = vmul.f32 %v256, %v288
      %v305 = vmul.f32 %v257, %v289
      %v306 = vmul.f32 %v258, %v290
      %v307 = vmul.f32 %v259, %v291
      %v308 = vmul.f32 %v260, %v292
      %v309 = vmul.f32 %v261, %v293
      %v310 = vmul.f32 %v262, %v294
      %v311 = vmul.f32 %v263, %v295
      %v312 = vmul.f32 %v264, %v296
      %v313 = vld [vmem:[%s1] sm:$0x1]
      %v315 = vlaneseq
      %v316 = vshrl.u32 %v315, 7
      %v317 = vsub.s32 0, %v316
      %v318 = vrot.slane %v313, %v317
      %v320 = vmul.f32 %v297, %v318
      %v321 = vmul.f32 %v298, %v318
      %v322 = vmul.f32 %v299, %v318
      %v323 = vmul.f32 %v300, %v318
      %v324 = vmul.f32 %v301, %v318
      %v325 = vmul.f32 %v302, %v318
      %v326 = vmul.f32 %v303, %v318
      %v327 = vmul.f32 %v304, %v318
      %v328 = vmul.f32 %v305, %v318
      %v329 = vmul.f32 %v306, %v318
      %v330 = vmul.f32 %v307, %v318
      %v331 = vmul.f32 %v308, %v318
      %v332 = vmul.f32 %v309, %v318
      %v333 = vmul.f32 %v310, %v318
      %v334 = vmul.f32 %v311, %v318
      %v335 = vmul.f32 %v312, %v318
      %v336 = vld [vmem:[%s2] sm:$0x1]
      %v338 = vlaneseq
      %v339 = vshrl.u32 %v338, 7
      %v340 = vsub.s32 0, %v339
      %v341 = vrot.slane %v336, %v340
      %v343 = vadd.f32 %v320, %v341
      %v344 = vadd.f32 %v321, %v341
      %v345 = vadd.f32 %v322, %v341
      %v346 = vadd.f32 %v323, %v341
      %v347 = vadd.f32 %v324, %v341
      %v348 = vadd.f32 %v325, %v341
      %v349 = vadd.f32 %v326, %v341
      %v350 = vadd.f32 %v327, %v341
      %v351 = vadd.f32 %v328, %v341
      %v352 = vadd.f32 %v329, %v341
      %v353 = vadd.f32 %v330, %v341
      %v354 = vadd.f32 %v331, %v341
      %v355 = vadd.f32 %v332, %v341
      %v356 = vadd.f32 %v333, %v341
      %v357 = vadd.f32 %v334, %v341
      %v358 = vadd.f32 %v335, %v341
      %v359 = vpack.c.bf16 %v344, %v343
      %v360 = vpack.c.bf16 %v346, %v345
      %v361 = vpack.c.bf16 %v348, %v347
      %v362 = vpack.c.bf16 %v350, %v349
      %v363 = vpack.c.bf16 %v352, %v351
      %v364 = vpack.c.bf16 %v354, %v353
      %v365 = vpack.c.bf16 %v356, %v355
      %v366 = vpack.c.bf16 %v358, %v357
      %v367 = vld [vmem:[#allocation6] sm:$0xf]
      %v368 = vld [vmem:[#allocation6 + $0x4] sm:$0xf]
      %v369 = vld [vmem:[#allocation6 + $0x8] sm:$0xf]
      %v370 = vld [vmem:[#allocation6 + $0xc] sm:$0xf]
      %v371 = vld [vmem:[#allocation6 + $0x10] sm:$0xf]
      %v372 = vld [vmem:[#allocation6 + $0x14] sm:$0xf]
      %v373 = vld [vmem:[#allocation6 + $0x18] sm:$0xf]
      %v374 = vld [vmem:[#allocation6 + $0x1c] sm:$0xf]
      %v375 = vld [vmem:[#allocation6 + $0x20] sm:$0xf]
      %v376 = vld [vmem:[#allocation6 + $0x24] sm:$0xf]
      %v377 = vld [vmem:[#allocation6 + $0x28] sm:$0xf]
      %v378 = vld [vmem:[#allocation6 + $0x2c] sm:$0xf]
      %v379 = vld [vmem:[#allocation6 + $0x30] sm:$0xf]
      %v380 = vld [vmem:[#allocation6 + $0x34] sm:$0xf]
      %v381 = vld [vmem:[#allocation6 + $0x38] sm:$0xf]
      %v382 = vld [vmem:[#allocation6 + $0x3c] sm:$0xf]
      %v383 = vld [vmem:[%s4] sm:$0x1]
      %v385 = vlaneseq
      %v386 = vshrl.u32 %v385, 7
      %v387 = vsub.s32 0, %v386
      %v388 = vrot.slane %v383, %v387
      %v406 = vunpack.c.l.b16 %v367
      %v407 = vunpack.c.l.b16 %v368
      %v408 = vunpack.c.l.b16 %v369
      %v409 = vunpack.c.l.b16 %v370
      %v410 = vunpack.c.l.b16 %v371
      %v411 = vunpack.c.l.b16 %v372
      %v412 = vunpack.c.l.b16 %v373
      %v413 = vunpack.c.l.b16 %v374
      %v414 = vunpack.c.l.b16 %v375
      %v415 = vunpack.c.l.b16 %v376
      %v416 = vunpack.c.l.b16 %v377
      %v417 = vunpack.c.l.b16 %v378
      %v418 = vunpack.c.l.b16 %v379
      %v419 = vunpack.c.l.b16 %v380
      %v420 = vunpack.c.l.b16 %v381
      %v421 = vunpack.c.l.b16 %v382
      %v422 = vpack.c.b16 %v407, %v406
      %v423 = vpack.c.b16 %v409, %v408
      %v424 = vpack.c.b16 %v411, %v410
      %v425 = vpack.c.b16 %v413, %v412
      %v426 = vpack.c.b16 %v415, %v414
      %v427 = vpack.c.b16 %v417, %v416
      %v428 = vpack.c.b16 %v419, %v418
      %v429 = vpack.c.b16 %v421, %v420
      %438 = vmatprep.subr.bf16.mxu0 0
      %439 = vmatpush1.bf16.msra.mxu0 %v422
      %440 = vmatprep.subr.bf16.mxu0 0
      %441 = vmatpush1.bf16.msra.mxu0 %v423
      %442 = vmatprep.subr.bf16.mxu0 0
      %443 = vmatpush1.bf16.msra.mxu0 %v424
      %444 = vmatprep.subr.bf16.mxu0 0
      %445 = vmatpush1.bf16.msra.mxu0 %v425
      %446 = vmatprep.subr.bf16.mxu0 0
      %447 = vmatpush1.bf16.msra.mxu0 %v426
      %448 = vmatprep.subr.bf16.mxu0 0
      %449 = vmatpush1.bf16.msra.mxu0 %v427
      %450 = vmatprep.subr.bf16.mxu0 0
      %451 = vmatpush1.bf16.msra.mxu0 %v428
      %452 = vmatprep.subr.bf16.mxu0 0
      %453 = vmatpush1.bf16.msra.mxu0 %v429
      %454 = vmatprep.subr.bf16.mxu0 0
      %455 = vmatpush1.bf16.msra.mxu0 0
      %456 = vmatprep.subr.bf16.mxu0 0
      %457 = vmatpush1.bf16.msra.mxu0 0
      %458 = vmatprep.subr.bf16.mxu0 0
      %459 = vmatpush1.bf16.msra.mxu0 0
      %460 = vmatprep.subr.bf16.mxu0 0
      %461 = vmatpush1.bf16.msra.mxu0 0
      %462 = vmatprep.subr.bf16.mxu0 0
      %463 = vmatpush1.bf16.msra.mxu0 0
      %464 = vmatprep.subr.bf16.mxu0 0
      %465 = vmatpush1.bf16.msra.mxu0 0
      %466 = vmatprep.subr.bf16.mxu0 0
      %467 = vmatpush1.bf16.msra.mxu0 0
      %468 = vmatprep.subr.bf16.mxu0 0
      %469 = vmatpush1.bf16.msra.mxu0 0
      %470 = vmatprep.mubr.bf16.mxu0 0
      %471 = vmatmul.mubr.bf16.gmra.mrb[0].mxu0 %v359
      %v472 = vpop.f32.mrb[0].mxu0
      %v473 = vadd.f32 %v388, %v472
      %v474 = vpop.f32.mrb[0].mxu0
      %v475 = vpop.f32.mrb[0].mxu0
      %v476 = vadd.f32 %v388, %v475
      %v477 = vpop.f32.mrb[0].mxu0
      %478 = vmatprep.mubr.bf16.mxu0 0
      %479 = vmatmul.mubr.bf16.gmra.mrb[0].mxu0 %v360
      %v480 = vpop.f32.mrb[0].mxu0
      %v481 = vadd.f32 %v388, %v480
      %v482 = vpop.f32.mrb[0].mxu0
      %v483 = vpop.f32.mrb[0].mxu0
      %v484 = vadd.f32 %v388, %v483
      %v485 = vpop.f32.mrb[0].mxu0
      %486 = vmatprep.mubr.bf16.mxu0 0
      %487 = vmatmul.mubr.bf16.gmra.mrb[0].mxu0 %v361
      %v488 = vpop.f32.mrb[0].mxu0
      %v489 = vadd.f32 %v388, %v488
      %v490 = vpop.f32.mrb[0].mxu0
      %v491 = vpop.f32.mrb[0].mxu0
      %v492 = vadd.f32 %v388, %v491
      %v493 = vpop.f32.mrb[0].mxu0
      %494 = vmatprep.mubr.bf16.mxu0 0
      %495 = vmatmul.mubr.bf16.gmra.mrb[0].mxu0 %v362
      %v496 = vpop.f32.mrb[0].mxu0
      %v497 = vadd.f32 %v388, %v496
      %v498 = vpop.f32.mrb[0].mxu0
      %v499 = vpop.f32.mrb[0].mxu0
      %v500 = vadd.f32 %v388, %v499
      %v501 = vpop.f32.mrb[0].mxu0
      %502 = vmatprep.mubr.bf16.mxu0 0
      %503 = vmatmul.mubr.bf16.gmra.mrb[0].mxu0 %v363
      %v504 = vpop.f32.mrb[0].mxu0
      %v505 = vadd.f32 %v388, %v504
      %v506 = vpop.f32.mrb[0].mxu0
      %v507 = vpop.f32.mrb[0].mxu0
      %v508 = vadd.f32 %v388, %v507
      %v509 = vpop.f32.mrb[0].mxu0
      %510 = vmatprep.mubr.bf16.mxu0 0
      %511 = vmatmul.mubr.bf16.gmra.mrb[0].mxu0 %v364
      %v512 = vpop.f32.mrb[0].mxu0
      %v513 = vadd.f32 %v388, %v512
      %v514 = vpop.f32.mrb[0].mxu0
      %v515 = vpop.f32.mrb[0].mxu0
      %v516 = vadd.f32 %v388, %v515
      %v517 = vpop.f32.mrb[0].mxu0
      %518 = vmatprep.mubr.bf16.mxu0 0
      %519 = vmatmul.mubr.bf16.gmra.mrb[0].mxu0 %v365
      %v520 = vpop.f32.mrb[0].mxu0
      %v521 = vadd.f32 %v388, %v520
      %v522 = vpop.f32.mrb[0].mxu0
      %v523 = vpop.f32.mrb[0].mxu0
      %v524 = vadd.f32 %v388, %v523
      %v525 = vpop.f32.mrb[0].mxu0
      %526 = vmatprep.mubr.bf16.mxu0 0
      %527 = vmatmul.mubr.bf16.gmra.mrb[0].mxu0 %v366
      %v528 = vpop.f32.mrb[0].mxu0
      %v529 = vadd.f32 %v388, %v528
      %v530 = vpop.f32.mrb[0].mxu0
      %v531 = vpop.f32.mrb[0].mxu0
      %v532 = vadd.f32 %v388, %v531
      %v533 = vpop.f32.mrb[0].mxu0
      %534 = vdwg.mxu0
      %v535 = vmax.f32 %v473, 0.0
      %v536 = vmax.f32 %v476, 0.0
      %v537 = vmax.f32 %v481, 0.0
      %v538 = vmax.f32 %v484, 0.0
      %v539 = vmax.f32 %v489, 0.0
      %v540 = vmax.f32 %v492, 0.0
      %v541 = vmax.f32 %v497, 0.0
      %v542 = vmax.f32 %v500, 0.0
      %v543 = vmax.f32 %v505, 0.0
      %v544 = vmax.f32 %v508, 0.0
      %v545 = vmax.f32 %v513, 0.0
      %v546 = vmax.f32 %v516, 0.0
      %v547 = vmax.f32 %v521, 0.0
      %v548 = vmax.f32 %v524, 0.0
      %v549 = vmax.f32 %v529, 0.0
      %v550 = vmax.f32 %v532, 0.0
      %v551 = vpack.c.bf16 %v536, %v535
      %v552 = vpack.c.bf16 %v538, %v537
      %v553 = vpack.c.bf16 %v540, %v539
      %v554 = vpack.c.bf16 %v542, %v541
      %v555 = vpack.c.bf16 %v544, %v543
      %v556 = vpack.c.bf16 %v546, %v545
      %v557 = vpack.c.bf16 %v548, %v547
      %v558 = vpack.c.bf16 %v550, %v549
      %559 = vst [vmem:[#allocation2] sm:$0xff] %v551
      %560 = vst [vmem:[#allocation2 + $0x8] sm:$0xff] %v552
      %561 = vst [vmem:[#allocation2 + $0x10] sm:$0xff] %v553
      %562 = vst [vmem:[#allocation2 + $0x18] sm:$0xff] %v554
      %563 = vst [vmem:[#allocation2 + $0x20] sm:$0xff] %v555
      %564 = vst [vmem:[#allocation2 + $0x28] sm:$0xff] %v556
      %565 = vst [vmem:[#allocation2 + $0x30] sm:$0xff] %v557
      %566 = vst [vmem:[#allocation2 + $0x38] sm:$0xff] %v558
    $region45: #{tpu_custom_call.1} parent=1 // pred_fallthru
      _
    %v567 = vld [vmem:[#allocation2] sm:$0xff]
    %v568 = vld [vmem:[#allocation2 + $0x8] sm:$0xff]
    %v569 = vld [vmem:[#allocation2 + $0x10] sm:$0xff]
    %v570 = vld [vmem:[#allocation2 + $0x18] sm:$0xff]
    %v571 = vld [vmem:[#allocation2 + $0x20] sm:$0xff]
    %v572 = vld [vmem:[#allocation2 + $0x28] sm:$0xff]
    %v573 = vld [vmem:[#allocation2 + $0x30] sm:$0xff]
    %v574 = vld [vmem:[#allocation2 + $0x38] sm:$0xff]
    %v575 = vld [vmem:[#allocation8] sm:$0xf]
    %v576 = vld [vmem:[#allocation8 + $0x4] sm:$0xf]
    %v577 = vld [vmem:[#allocation8 + $0x8] sm:$0xf]
    %v578 = vld [vmem:[#allocation8 + $0xc] sm:$0xf]
    %v579 = vld [vmem:[#allocation8 + $0x10] sm:$0xf]
    %v580 = vld [vmem:[#allocation8 + $0x14] sm:$0xf]
    %v581 = vld [vmem:[#allocation8 + $0x18] sm:$0xf]
    %v582 = vld [vmem:[#allocation8 + $0x1c] sm:$0xf]
    %v583 = vld [vmem:[#allocation8 + $0x20] sm:$0xf]
    %v584 = vld [vmem:[#allocation8 + $0x24] sm:$0xf]
    %v585 = vld [vmem:[#allocation8 + $0x28] sm:$0xf]
    %v586 = vld [vmem:[#allocation8 + $0x2c] sm:$0xf]
    %v587 = vld [vmem:[#allocation8 + $0x30] sm:$0xf]
    %v588 = vld [vmem:[#allocation8 + $0x34] sm:$0xf]
    %v589 = vld [vmem:[#allocation8 + $0x38] sm:$0xf]
    %v590 = vld [vmem:[#allocation8 + $0x3c] sm:$0xf]
    %s591 = smul.u32 0, 128
    %s592 = sshra.s32 %s591, 7
    %s593 = sand.u32 %s591, 127
    %s594 = scalar_lea.vmem [#allocation3], %s592
    %v595 = vld [vmem:[%s594] sm:$0xff]
    %v596 = vld [vmem:[%s594 + $0x8] sm:$0xff]
    %v597 = vld [vmem:[%s594 + $0x10] sm:$0xff]
    %v598 = vld [vmem:[%s594 + $0x18] sm:$0xff]
    %v599 = vld [vmem:[%s594 + $0x20] sm:$0xff]
    %v600 = vld [vmem:[%s594 + $0x28] sm:$0xff]
    %v601 = vld [vmem:[%s594 + $0x30] sm:$0xff]
    %v602 = vld [vmem:[%s594 + $0x38] sm:$0xff]
    %v603 = vld [vmem:[%s594 + $0x40] sm:$0xff]
    %v604 = vld [vmem:[%s594 + $0x48] sm:$0xff]
    %v605 = vld [vmem:[%s594 + $0x50] sm:$0xff]
    %v606 = vld [vmem:[%s594 + $0x58] sm:$0xff]
    %v607 = vld [vmem:[%s594 + $0x60] sm:$0xff]
    %v608 = vld [vmem:[%s594 + $0x68] sm:$0xff]
    %v609 = vld [vmem:[%s594 + $0x70] sm:$0xff]
    %v610 = vld [vmem:[%s594 + $0x78] sm:$0xff]
    %v611 = vld [vmem:[%s6] sm:$0x1]
    %v613 = vlaneseq
    %v614 = vshrl.u32 %v613, 7
    %v615 = vsub.s32 0, %v614
    %v616 = vrot.slane %v611, %v615
    %v634 = vunpack.c.l.b16 %v575
    %v635 = vunpack.c.l.b16 %v576
    %v636 = vunpack.c.l.b16 %v577
    %v637 = vunpack.c.l.b16 %v578
    %v638 = vunpack.c.l.b16 %v579
    %v639 = vunpack.c.l.b16 %v580
    %v640 = vunpack.c.l.b16 %v581
    %v641 = vunpack.c.l.b16 %v582
    %v642 = vunpack.c.l.b16 %v583
    %v643 = vunpack.c.l.b16 %v584
    %v644 = vunpack.c.l.b16 %v585
    %v645 = vunpack.c.l.b16 %v586
    %v646 = vunpack.c.l.b16 %v587
    %v647 = vunpack.c.l.b16 %v588
    %v648 = vunpack.c.l.b16 %v589
    %v649 = vunpack.c.l.b16 %v590
    %v650 = vpack.c.b16 %v635, %v634
    %v651 = vpack.c.b16 %v637, %v636
    %v652 = vpack.c.b16 %v639, %v638
    %v653 = vpack.c.b16 %v641, %v640
    %v654 = vpack.c.b16 %v643, %v642
    %v655 = vpack.c.b16 %v645, %v644
    %v656 = vpack.c.b16 %v647, %v646
    %v657 = vpack.c.b16 %v649, %v648
    %666 = vmatprep.subr.bf16.mxu0 0
    %667 = vmatpush1.bf16.msra.mxu0 %v650
    %668 = vmatprep.subr.bf16.mxu0 0
    %669 = vmatpush1.bf16.msra.mxu0 %v651
    %670 = vmatprep.subr.bf16.mxu0 0
    %671 = vmatpush1.bf16.msra.mxu0 %v652
    %672 = vmatprep.subr.bf16.mxu0 0
    %673 = vmatpush1.bf16.msra.mxu0 %v653
    %674 = vmatprep.subr.bf16.mxu0 0
    %675 = vmatpush1.bf16.msra.mxu0 %v654
    %676 = vmatprep.subr.bf16.mxu0 0
    %677 = vmatpush1.bf16.msra.mxu0 %v655
    %678 = vmatprep.subr.bf16.mxu0 0
    %679 = vmatpush1.bf16.msra.mxu0 %v656
    %680 = vmatprep.subr.bf16.mxu0 0
    %681 = vmatpush1.bf16.msra.mxu0 %v657
    %682 = vmatprep.subr.bf16.mxu0 0
    %683 = vmatpush1.bf16.msra.mxu0 0
    %684 = vmatprep.subr.bf16.mxu0 0
    %685 = vmatpush1.bf16.msra.mxu0 0
    %686 = vmatprep.subr.bf16.mxu0 0
    %687 = vmatpush1.bf16.msra.mxu0 0
    %688 = vmatprep.subr.bf16.mxu0 0
    %689 = vmatpush1.bf16.msra.mxu0 0
    %690 = vmatprep.subr.bf16.mxu0 0
    %691 = vmatpush1.bf16.msra.mxu0 0
    %692 = vmatprep.subr.bf16.mxu0 0
    %693 = vmatpush1.bf16.msra.mxu0 0
    %694 = vmatprep.subr.bf16.mxu0 0
    %695 = vmatpush1.bf16.msra.mxu0 0
    %696 = vmatprep.subr.bf16.mxu0 0
    %697 = vmatpush1.bf16.msra.mxu0 0
    %698 = vmatprep.mubr.bf16.mxu0 0
    %699 = vmatmul.mubr.bf16.gmra.mrb[0].mxu0 %v567
    %v700 = vpop.f32.mrb[0].mxu0
    %v701 = vadd.f32 %v616, %v700
    %v702 = vpop.f32.mrb[0].mxu0
    %v703 = vpop.f32.mrb[0].mxu0
    %v704 = vadd.f32 %v616, %v703
    %v705 = vpop.f32.mrb[0].mxu0
    %706 = vmatprep.mubr.bf16.mxu0 0
    %707 = vmatmul.mubr.bf16.gmra.mrb[0].mxu0 %v568
    %v708 = vpop.f32.mrb[0].mxu0
    %v709 = vadd.f32 %v616, %v708
    %v710 = vpop.f32.mrb[0].mxu0
    %v711 = vpop.f32.mrb[0].mxu0
    %v712 = vadd.f32 %v616, %v711
    %v713 = vpop.f32.mrb[0].mxu0
    %714 = vmatprep.mubr.bf16.mxu0 0
    %715 = vmatmul.mubr.bf16.gmra.mrb[0].mxu0 %v569
    %v716 = vpop.f32.mrb[0].mxu0
    %v717 = vadd.f32 %v616, %v716
    %v718 = vpop.f32.mrb[0].mxu0
    %v719 = vpop.f32.mrb[0].mxu0
    %v720 = vadd.f32 %v616, %v719
    %v721 = vpop.f32.mrb[0].mxu0
    %722 = vmatprep.mubr.bf16.mxu0 0
    %723 = vmatmul.mubr.bf16.gmra.mrb[0].mxu0 %v570
    %v724 = vpop.f32.mrb[0].mxu0
    %v725 = vadd.f32 %v616, %v724
    %v726 = vpop.f32.mrb[0].mxu0
    %v727 = vpop.f32.mrb[0].mxu0
    %v728 = vadd.f32 %v616, %v727
    %v729 = vpop.f32.mrb[0].mxu0
    %730 = vmatprep.mubr.bf16.mxu0 0
    %731 = vmatmul.mubr.bf16.gmra.mrb[0].mxu0 %v571
    %v732 = vpop.f32.mrb[0].mxu0
    %v733 = vadd.f32 %v616, %v732
    %v734 = vpop.f32.mrb[0].mxu0
    %v735 = vpop.f32.mrb[0].mxu0
    %v736 = vadd.f32 %v616, %v735
    %v737 = vpop.f32.mrb[0].mxu0
    %738 = vmatprep.mubr.bf16.mxu0 0
    %739 = vmatmul.mubr.bf16.gmra.mrb[0].mxu0 %v572
    %v740 = vpop.f32.mrb[0].mxu0
    %v741 = vadd.f32 %v616, %v740
    %v742 = vpop.f32.mrb[0].mxu0
    %v743 = vpop.f32.mrb[0].mxu0
    %v744 = vadd.f32 %v616, %v743
    %v745 = vpop.f32.mrb[0].mxu0
    %746 = vmatprep.mubr.bf16.mxu0 0
    %747 = vmatmul.mubr.bf16.gmra.mrb[0].mxu0 %v573
    %v748 = vpop.f32.mrb[0].mxu0
    %v749 = vadd.f32 %v616, %v748
    %v750 = vpop.f32.mrb[0].mxu0
    %v751 = vpop.f32.mrb[0].mxu0
    %v752 = vadd.f32 %v616, %v751
    %v753 = vpop.f32.mrb[0].mxu0
    %754 = vmatprep.mubr.bf16.mxu0 0
    %755 = vmatmul.mubr.bf16.gmra.mrb[0].mxu0 %v574
    %v756 = vpop.f32.mrb[0].mxu0
    %v757 = vadd.f32 %v616, %v756
    %v758 = vpop.f32.mrb[0].mxu0
    %v759 = vpop.f32.mrb[0].mxu0
    %v760 = vadd.f32 %v616, %v759
    %v761 = vpop.f32.mrb[0].mxu0
    %762 = vdwg.mxu0
    %v763 = vadd.f32 %v701, %v595
    %v764 = vadd.f32 %v704, %v596
    %v765 = vadd.f32 %v709, %v597
    %v766 = vadd.f32 %v712, %v598
    %v767 = vadd.f32 %v717, %v599
    %v768 = vadd.f32 %v720, %v600
    %v769 = vadd.f32 %v725, %v601
    %v770 = vadd.f32 %v728, %v602
    %v771 = vadd.f32 %v733, %v603
    %v772 = vadd.f32 %v736, %v604
    %v773 = vadd.f32 %v741, %v605
    %v774 = vadd.f32 %v744, %v606
    %v775 = vadd.f32 %v749, %v607
    %v776 = vadd.f32 %v752, %v608
    %v777 = vadd.f32 %v757, %v609
    %v778 = vadd.f32 %v760, %v610
    %779 = vst [vmem:[#allocation9] sm:$0xff] %v763
    %780 = vst [vmem:[#allocation9 + $0x8] sm:$0xff] %v764
    %781 = vst [vmem:[#allocation9 + $0x10] sm:$0xff] %v765
    %782 = vst [vmem:[#allocation9 + $0x18] sm:$0xff] %v766
    %783 = vst [vmem:[#allocation9 + $0x20] sm:$0xff] %v767
    %784 = vst [vmem:[#allocation9 + $0x28] sm:$0xff] %v768
    %785 = vst [vmem:[#allocation9 + $0x30] sm:$0xff] %v769
    %786 = vst [vmem:[#allocation9 + $0x38] sm:$0xff] %v770
    %787 = vst [vmem:[#allocation9 + $0x40] sm:$0xff] %v771
    %788 = vst [vmem:[#allocation9 + $0x48] sm:$0xff] %v772
    %789 = vst [vmem:[#allocation9 + $0x50] sm:$0xff] %v773
    %790 = vst [vmem:[#allocation9 + $0x58] sm:$0xff] %v774
    %791 = vst [vmem:[#allocation9 + $0x60] sm:$0xff] %v775
    %792 = vst [vmem:[#allocation9 + $0x68] sm:$0xff] %v776
    %793 = vst [vmem:[#allocation9 + $0x70] sm:$0xff] %v777
    %794 = vst [vmem:[#allocation9 + $0x78] sm:$0xff] %v778
    // Predicated region
    $region46: #{tpu_custom_call.1} parent=1 // pred_check
      _
    $region47: #{tpu_custom_call.1} parent=1 // pred_check_branch
      %796 = sbr.rel (0) target = $region49
    $region48: #{tpu_custom_call.1} parent=1 // pred_region
      %s798 = ssub.s32 2048, 2048
      %799 = vsyncadd [#allocation5], %s798
      %s800 = sshll.u32 [#allocation9], 4
      %s801 = int_to_ptr.vmem [resolvable:$true] %s800
      %806 = dma.vmem_to_hbm [thread:$0]  %s801, 2048, %s7, [#allocation5], 128, 128, 8
    $region49: #{tpu_custom_call.1} parent=1 // pred_fallthru
      _
    // Predicated region
    $region50: #{tpu_custom_call.1} parent=1 // pred_check
      _
    $region51: #{tpu_custom_call.1} parent=1 // pred_check_branch
      %808 = sbr.rel (0) target = $region53
    $region52: #{tpu_custom_call.1} parent=1 // pred_region
      %809 = dma.done [#allocation5], 2048
    $region53: #{tpu_custom_call.1} parent=1 // pred_fallthru
      _
    %810 = vsyncpa [#allocation4], 1
    %811 = vsyncpa [#allocation7], 1
    %812 = vsyncpa [#allocation5], 1

</llo_original>
